<compile_context>
chip_gen: v6e
topology: v6e:2x2x1
jax: 0.10.0
libtpu: 0.0.40
codegen_flags: <defaults>
</compile_context>

<pallas_src>
import functools

import jax
import jax.numpy as jnp
from jax.experimental import pallas as pl
from jax.experimental.pallas import tpu as pltpu


_INV_SQRT2 = 0.7071067811865476


def _gelu_exact(x):
    # PyTorch nn.GELU() default (approximate='none'): 0.5*x*(1+erf(x/sqrt(2)))
    return 0.5 * x * (1.0 + jax.lax.erf(x * _INV_SQRT2))


def mil_kernel(inv_temp, tb, bag, n_out, z,
               bags_ref,                  # (1, tb*bag, n_feats)
               mask_ref,                  # (1, tb, bag)   1.0 = valid instance
               w_enc_ref, b_enc_ref,      # (n_feats, z), (1, z)
               w_a1_ref, b_a1_ref,        # (z, n_lat), (1, n_lat)
               w_a2_ref, b_a2_ref,        # (n_lat, n_out), (1, n_out)
               w_h1_ref, b_h1_ref,        # (n_out*z, hid), (1, hid)   [BN folded in]
               w_h2_ref, b_h2_ref,        # (hid, no_pad), (1, no_pad) [lane-padded]
               out_ref):                  # (tb, no_pad)
    x = bags_ref[0]                                                      # (tb*bag, n_feats)

    # encoder: Linear -> ReLU  (all TB bags folded into the M dimension)
    emb = jnp.dot(x, w_enc_ref[...], preferred_element_type=jnp.float32) + b_enc_ref[...]
    emb = jnp.maximum(emb, 0.0)                                          # (tb*bag, z)

    # attention MLP: Linear -> GELU(exact) -> Linear
    h = jnp.dot(emb, w_a1_ref[...], preferred_element_type=jnp.float32) + b_a1_ref[...]
    h = _gelu_exact(h)
    raw = jnp.dot(h, w_a2_ref[...], preferred_element_type=jnp.float32) + b_a2_ref[...]   # (tb*bag, n_out)

    # length mask (-inf outside each bag) then per-bag softmax over instances
    raw3 = raw.reshape(tb, bag, n_out)
    mask3 = mask_ref[0][:, :, None] > 0.5                                # (tb, bag, 1)
    masked = jnp.where(mask3, raw3, -jnp.inf) * inv_temp                 # (tb, bag, n_out)
    mx = jnp.max(masked, axis=1, keepdims=True)
    e = jnp.exp(masked - mx)
    attn = e / jnp.sum(e, axis=1, keepdims=True)                         # (tb, bag, n_out)

    # per-class weighted pooling: contract over the bag axis (no explicit .T)
    emb3 = emb.reshape(tb, bag, z)
    feats = jnp.einsum("tsc,tsz->tcz", attn, emb3,
                       preferred_element_type=jnp.float32)               # (tb, n_out, z)

    # head: Flatten (class-major == torch.cat(class_features, dim=1)) ->
    #       [BatchNorm folded into w_h1/b_h1] -> Dropout(identity) ->
    #       Linear -> ReLU -> Linear (output lane-padded to a multiple of 128)
    final = feats.reshape(tb, n_out * z)                                 # (tb, n_out*z)
    h1 = jnp.dot(final, w_h1_ref[...], preferred_element_type=jnp.float32) + b_h1_ref[...]
    h1 = jnp.maximum(h1, 0.0)
    out_ref[...] = jnp.dot(h1, w_h2_ref[...],
                           preferred_element_type=jnp.float32) + b_h2_ref[...]


def attention_mil_forward(bags, lens, params, *, temperature=1.0, block_b=None):
    B, bag, n_feats = bags.shape
    z = params["w_enc"].shape[1]
    n_lat = params["w_a1"].shape[1]
    n_out = params["w_a2"].shape[1]
    hid = params["w_h1"].shape[1]
    D = n_out * z

    # Batch tile: amortizes the ~0.35us/step overhead and feeds the MXU a tall
    # LHS.  Keep 2 * TB*bag*n_feats*4B (double-buffered bags) inside VMEM.
    tb = block_b or max(1, min(B, 128))
    g = pl.cdiv(B, tb)
    bp = g * tb
    if bp != B:
        bags = jnp.pad(bags, ((0, bp - B), (0, 0), (0, 0)))
        # padded bags get full-length masks (finite softmax); rows are dropped.
        lens = jnp.pad(lens, (0, bp - B), constant_values=bag)

    # Fold eval-mode BatchNorm1d into the head's first Linear (zero numerical
    # change in eval mode up to float re-association).
    scale = params["bn_g"] * jax.lax.rsqrt(params["bn_v"] + 1e-5)        # (D,)
    shift = params["bn_b"] - params["bn_m"] * scale                      # (D,)
    w_h1p = params["w_h1"] * scale[:, None]                              # (D, hid)
    b_h1p = params["b_h1"] + shift @ params["w_h1"]                      # (hid,)

    # Lane-pad the head's last Linear so the kernel's output store is a full
    # unmasked 128-lane store; extra columns are exactly zero and sliced off.
    no_pad = ((n_out + 127) // 128) * 128
    w_h2p = jnp.pad(params["w_h2"], ((0, 0), (0, no_pad - n_out)))       # (hid, no_pad)
    b_h2p = jnp.pad(params["b_h2"], (0, no_pad - n_out))                 # (no_pad,)

    # Host-side per-instance validity mask (bag in the lane dim; replaces the
    # in-kernel lens gather and keeps the VMEM block compact).
    valid = (jnp.arange(bag, dtype=jnp.int32)[None, :] < lens[:, None]).astype(jnp.float32)
    mask = valid.reshape(g, tb, bag)
    bags2 = bags.reshape(g, tb * bag, n_feats)

    def full(shape):
        return pl.BlockSpec(shape, lambda i: (0,) * len(shape))

    grid_spec = pltpu.PrefetchScalarGridSpec(
        num_scalar_prefetch=0,
        grid=(g,),
        in_specs=[
            pl.BlockSpec((1, tb * bag, n_feats), lambda i: (i, 0, 0)),
            pl.BlockSpec((1, tb, bag), lambda i: (i, 0, 0)),
            full((n_feats, z)), full((1, z)),
            full((z, n_lat)), full((1, n_lat)),
            full((n_lat, n_out)), full((1, n_out)),
            full((D, hid)), full((1, hid)),
            full((hid, no_pad)), full((1, no_pad)),
        ],
        out_specs=pl.BlockSpec((tb, no_pad), lambda i: (i, 0)),
    )

    kernel = functools.partial(mil_kernel, float(1.0 / temperature), tb, bag, n_out, z)
    out = pl.pallas_call(
        kernel,
        grid_spec=grid_spec,
        out_shape=jax.ShapeDtypeStruct((bp, no_pad), jnp.float32),
        compiler_params=pltpu.CompilerParams(
            dimension_semantics=("parallel",)),   # batch axis shards across TCs on v7x
    )(bags2, mask,
      params["w_enc"], params["b_enc"].reshape(1, z),
      params["w_a1"], params["b_a1"].reshape(1, n_lat),
      params["w_a2"], params["b_a2"].reshape(1, n_out),
      w_h1p, b_h1p.reshape(1, hid),
      w_h2p, b_h2p.reshape(1, no_pad))
    return out[:B, :n_out]


def reference(bags, lens, params, temperature=1.0):
    """Pure-JAX reference matching the PyTorch forward (eval mode)."""
    emb = jax.nn.relu(bags @ params["w_enc"] + params["b_enc"])
    h = _gelu_exact(emb @ params["w_a1"] + params["b_a1"])
    raw = h @ params["w_a2"] + params["b_a2"]
    B, bag, _ = emb.shape
    mask = (jnp.arange(bag)[None, :] < lens[:, None])[..., None]
    masked = jnp.where(mask, raw, -jnp.inf) / temperature
    w = jax.nn.softmax(masked, axis=1)
    feats = jnp.einsum("bsc,bsz->bcz", w, emb)              # (B, n_out, z)
    final = feats.reshape(B, -1)                            # class-major concat
    xn = (final - params["bn_m"]) / jnp.sqrt(params["bn_v"] + 1e-5) \
         * params["bn_g"] + params["bn_b"]
    h1 = jax.nn.relu(xn @ params["w_h1"] + params["b_h1"])
    return h1 @ params["w_h2"] + params["b_h2"]


if __name__ == "__main__":
    key = jax.random.PRNGKey(0)
    bag, n_feats, z, n_out = 8, 32, 32, 4
    n_lat = (z + 1) // 2
    hid = 256
    D = z * n_out

    keys = jax.random.split(key, 18)

    def init(k, shape, scale=0.1):
        return (scale * jax.random.normal(k, shape)).astype(jnp.float32)

    params = {
        "w_enc": init(keys[0], (n_feats, z)), "b_enc": init(keys[1], (z,)),
        "w_a1": init(keys[2], (z, n_lat)),    "b_a1": init(keys[3], (n_lat,)),
        "w_a2": init(keys[4], (n_lat, n_out)), "b_a2": init(keys[5], (n_out,)),
        "bn_g": (1.0 + 0.1 * jax.random.normal(keys[6], (D,))).astype(jnp.float32),
        "bn_b": init(keys[7], (D,)),
        "bn_m": init(keys[8], (D,)),
        "bn_v": (1.0 + 0.1 * jnp.abs(jax.random.normal(keys[9], (D,)))).astype(jnp.float32),
        "w_h1": init(keys[10], (D, hid)),     "b_h1": init(keys[11], (hid,)),
        "w_h2": init(keys[12], (hid, n_out)), "b_h2": init(keys[13], (n_out,)),
    }

    # Test 1: B=2, single grid step (TB = B).
    B1 = 2
    bags1 = jax.random.normal(keys[14], (B1, bag, n_feats), dtype=jnp.float32)
    lens1 = jnp.array([5, 8], dtype=jnp.int32)
    out1 = jax.block_until_ready(attention_mil_forward(bags1, lens1, params))
    ref1 = reference(bags1, lens1, params)
    assert out1.shape == (B1, n_out)
    assert jnp.allclose(out1, ref1, rtol=1e-4, atol=1e-4), (out1, ref1)

    # Test 2: B=10 with TB=8 -> multi-step grid + batch padding path.
    B2 = 10
    bags2 = jax.random.normal(keys[15], (B2, bag, n_feats), dtype=jnp.float32)
    lens2 = jax.random.randint(keys[16], (B2,), 1, bag + 1).astype(jnp.int32)
    out2 = jax.block_until_ready(
        attention_mil_forward(bags2, lens2, params, temperature=1.0, block_b=8))
    ref2 = reference(bags2, lens2, params, temperature=1.0)
    assert out2.shape == (B2, n_out)
    assert jnp.allclose(out2, ref2, rtol=1e-4, atol=1e-4), (out2, ref2)

    print("KERNEL_OK")
</pallas_src>

<mosaic_0001>
module attributes {stable_mosaic.version = 11 : i64} {
  func.func @mil_kernel(%arg0: i32, %arg1: memref<1x16x32xf32, #tpu.memory_space<vmem>>, %arg2: memref<1x2x8xf32, #tpu.memory_space<vmem>>, %arg3: memref<32x32xf32, #tpu.memory_space<vmem>>, %arg4: memref<1x32xf32, #tpu.memory_space<vmem>>, %arg5: memref<32x16xf32, #tpu.memory_space<vmem>>, %arg6: memref<1x16xf32, #tpu.memory_space<vmem>>, %arg7: memref<16x4xf32, #tpu.memory_space<vmem>>, %arg8: memref<1x4xf32, #tpu.memory_space<vmem>>, %arg9: memref<128x256xf32, #tpu.memory_space<vmem>>, %arg10: memref<1x256xf32, #tpu.memory_space<vmem>>, %arg11: memref<256x128xf32, #tpu.memory_space<vmem>>, %arg12: memref<1x128xf32, #tpu.memory_space<vmem>>, %arg13: memref<2x128xf32, #tpu.memory_space<vmem>>) attributes {dimension_semantics = [#tpu.dimension_semantics<parallel>], iteration_bounds = array<i64: 1>, scalar_prefetch = 0 : i64, scratch_operands = 0 : i64, tpu.core_type = #tpu.core_type<tc>, window_params = [{transform_indices = @transform_0, window_bounds = array<i64: 1, 16, 32>}, {transform_indices = @transform_1, window_bounds = array<i64: 1, 2, 8>}, {pipeline_mode = #tpu.pipeline_mode<synchronous>, transform_indices = @transform_2, window_bounds = array<i64: 32, 32>}, {pipeline_mode = #tpu.pipeline_mode<synchronous>, transform_indices = @transform_3, window_bounds = array<i64: 1, 32>}, {pipeline_mode = #tpu.pipeline_mode<synchronous>, transform_indices = @transform_4, window_bounds = array<i64: 32, 16>}, {pipeline_mode = #tpu.pipeline_mode<synchronous>, transform_indices = @transform_5, window_bounds = array<i64: 1, 16>}, {pipeline_mode = #tpu.pipeline_mode<synchronous>, transform_indices = @transform_6, window_bounds = array<i64: 16, 4>}, {pipeline_mode = #tpu.pipeline_mode<synchronous>, transform_indices = @transform_7, window_bounds = array<i64: 1, 4>}, {pipeline_mode = #tpu.pipeline_mode<synchronous>, transform_indices = @transform_8, window_bounds = array<i64: 128, 256>}, {pipeline_mode = #tpu.pipeline_mode<synchronous>, transform_indices = @transform_9, window_bounds = array<i64: 1, 256>}, {pipeline_mode = #tpu.pipeline_mode<synchronous>, transform_indices = @transform_10, window_bounds = array<i64: 256, 128>}, {pipeline_mode = #tpu.pipeline_mode<synchronous>, transform_indices = @transform_11, window_bounds = array<i64: 1, 128>}, {transform_indices = @transform_12, window_bounds = array<i64: 2, 128>}]} {
    %c0 = arith.constant 0 : index
    %c0_0 = arith.constant 0 : index
    %c0_1 = arith.constant 0 : index
    %0 = vector.load %arg1[%c0, %c0_0, %c0_1] : memref<1x16x32xf32, #tpu.memory_space<vmem>>, vector<1x16x32xf32>
    %1 = vector.shape_cast %0 : vector<1x16x32xf32> to vector<16x32xf32>
    %c0_2 = arith.constant 0 : index
    %c0_3 = arith.constant 0 : index
    %2 = vector.load %arg3[%c0_2, %c0_3] : memref<32x32xf32, #tpu.memory_space<vmem>>, vector<32x32xf32>
    %cst = arith.constant dense<0.000000e+00> : vector<16x32xf32>
    %3 = tpu.matmul %1, %2, %cst {dimension_numbers = #tpu.dot_dimension_numbers<[1], [0], [0], [1], [0, 0, 1, 1], [], []>} : vector<16x32xf32>, vector<32x32xf32>, vector<16x32xf32> -> vector<16x32xf32>
    %c0_4 = arith.constant 0 : index
    %c0_5 = arith.constant 0 : index
    %4 = vector.load %arg4[%c0_4, %c0_5] : memref<1x32xf32, #tpu.memory_space<vmem>>, vector<1x32xf32>
    %5 = vector.broadcast %4 : vector<1x32xf32> to vector<16x32xf32>
    %6 = arith.addf %3, %5 : vector<16x32xf32>
    %cst_6 = arith.constant 0.000000e+00 : f32
    %7 = vector.broadcast %cst_6 : f32 to vector<16x32xf32>
    %8 = arith.maximumf %6, %7 : vector<16x32xf32>
    %c0_7 = arith.constant 0 : index
    %c0_8 = arith.constant 0 : index
    %9 = vector.load %arg5[%c0_7, %c0_8] : memref<32x16xf32, #tpu.memory_space<vmem>>, vector<32x16xf32>
    %cst_9 = arith.constant dense<0.000000e+00> : vector<16x16xf32>
    %10 = tpu.matmul %8, %9, %cst_9 {dimension_numbers = #tpu.dot_dimension_numbers<[1], [0], [0], [1], [0, 0, 1, 1], [], []>} : vector<16x32xf32>, vector<32x16xf32>, vector<16x16xf32> -> vector<16x16xf32>
    %c0_10 = arith.constant 0 : index
    %c0_11 = arith.constant 0 : index
    %11 = vector.load %arg6[%c0_10, %c0_11] : memref<1x16xf32, #tpu.memory_space<vmem>>, vector<1x16xf32>
    %12 = vector.broadcast %11 : vector<1x16xf32> to vector<16x16xf32>
    %13 = arith.addf %10, %12 : vector<16x16xf32>
    %cst_12 = arith.constant 5.000000e-01 : f32
    %14 = vector.broadcast %cst_12 : f32 to vector<16x16xf32>
    %15 = arith.mulf %14, %13 : vector<16x16xf32>
    %cst_13 = arith.constant 0.707106769 : f32
    %16 = vector.broadcast %cst_13 : f32 to vector<16x16xf32>
    %17 = arith.mulf %13, %16 : vector<16x16xf32>
    %18 = math.erf %17 : vector<16x16xf32>
    %cst_14 = arith.constant 1.000000e+00 : f32
    %19 = vector.broadcast %cst_14 : f32 to vector<16x16xf32>
    %20 = arith.addf %19, %18 : vector<16x16xf32>
    %21 = arith.mulf %15, %20 : vector<16x16xf32>
    %c0_15 = arith.constant 0 : index
    %c0_16 = arith.constant 0 : index
    %22 = vector.load %arg7[%c0_15, %c0_16] : memref<16x4xf32, #tpu.memory_space<vmem>>, vector<16x4xf32>
    %cst_17 = arith.constant dense<0.000000e+00> : vector<16x4xf32>
    %23 = tpu.matmul %21, %22, %cst_17 {dimension_numbers = #tpu.dot_dimension_numbers<[1], [0], [0], [1], [0, 0, 1, 1], [], []>} : vector<16x16xf32>, vector<16x4xf32>, vector<16x4xf32> -> vector<16x4xf32>
    %c0_18 = arith.constant 0 : index
    %c0_19 = arith.constant 0 : index
    %24 = vector.load %arg8[%c0_18, %c0_19] : memref<1x4xf32, #tpu.memory_space<vmem>>, vector<1x4xf32>
    %25 = vector.broadcast %24 : vector<1x4xf32> to vector<16x4xf32>
    %26 = arith.addf %23, %25 : vector<16x4xf32>
    %27 = vector.shape_cast %26 : vector<16x4xf32> to vector<2x8x4xf32>
    %c0_20 = arith.constant 0 : index
    %c0_21 = arith.constant 0 : index
    %c0_22 = arith.constant 0 : index
    %28 = vector.load %arg2[%c0_20, %c0_21, %c0_22] : memref<1x2x8xf32, #tpu.memory_space<vmem>>, vector<1x2x8xf32>
    %29 = vector.shape_cast %28 : vector<1x2x8xf32> to vector<2x8xf32>
    %30 = vector.shape_cast %29 : vector<2x8xf32> to vector<2x8x1xf32>
    %cst_23 = arith.constant 5.000000e-01 : f32
    %31 = vector.broadcast %cst_23 : f32 to vector<2x8x1xf32>
    %32 = arith.cmpf ogt, %30, %31 : vector<2x8x1xf32>
    %cst_24 = arith.constant 0xFF800000 : f32
    %33 = vector.shape_cast %32 : vector<2x8x1xi1> to vector<2x8x1xi1>
    %34 = vector.broadcast %33 : vector<2x8x1xi1> to vector<2x8x4xi1>
    %35 = vector.broadcast %cst_24 : f32 to vector<2x8x4xf32>
    %36 = arith.select %34, %27, %35 : vector<2x8x4xi1>, vector<2x8x4xf32>
    %cst_25 = arith.constant 1.000000e+00 : f32
    %37 = vector.broadcast %cst_25 : f32 to vector<2x8x4xf32>
    %38 = arith.mulf %36, %37 : vector<2x8x4xf32>
    %cst_26 = arith.constant dense<0xFF800000> : vector<2x4xf32>
    %39 = vector.multi_reduction <maximumf>, %38, %cst_26 [1] : vector<2x8x4xf32> to vector<2x4xf32>
    %40 = vector.shape_cast %39 : vector<2x4xf32> to vector<2x1x4xf32>
    %41 = vector.broadcast %40 : vector<2x1x4xf32> to vector<2x8x4xf32>
    %42 = arith.subf %38, %41 : vector<2x8x4xf32>
    %43 = math.exp %42 : vector<2x8x4xf32>
    %cst_27 = arith.constant dense<0.000000e+00> : vector<2x4xf32>
    %44 = vector.multi_reduction <add>, %43, %cst_27 [1] : vector<2x8x4xf32> to vector<2x4xf32>
    %45 = vector.shape_cast %44 : vector<2x4xf32> to vector<2x1x4xf32>
    %46 = vector.broadcast %45 : vector<2x1x4xf32> to vector<2x8x4xf32>
    %47 = arith.divf %43, %46 : vector<2x8x4xf32>
    %48 = vector.shape_cast %8 : vector<16x32xf32> to vector<2x8x32xf32>
    "tpu.trace_start"() <{level = 10 : i32, message = "tsc,tsz->tcz"}> : () -> ()
    %cst_28 = arith.constant dense<0.000000e+00> : vector<2x4x32xf32>
    %49 = tpu.matmul %47, %48, %cst_28 {dimension_numbers = #tpu.dot_dimension_numbers<[1], [1], [2], [2], [0, 0, 0, 2, 1, 2], [0], [0]>} : vector<2x8x4xf32>, vector<2x8x32xf32>, vector<2x4x32xf32> -> vector<2x4x32xf32>
    "tpu.trace_stop"() : () -> ()
    %50 = vector.shape_cast %49 : vector<2x4x32xf32> to vector<2x128xf32>
    %c0_29 = arith.constant 0 : index
    %c0_30 = arith.constant 0 : index
    %51 = vector.load %arg9[%c0_29, %c0_30] : memref<128x256xf32, #tpu.memory_space<vmem>>, vector<128x256xf32>
    %cst_31 = arith.constant dense<0.000000e+00> : vector<2x256xf32>
    %52 = tpu.matmul %50, %51, %cst_31 {dimension_numbers = #tpu.dot_dimension_numbers<[1], [0], [0], [1], [0, 0, 1, 1], [], []>} : vector<2x128xf32>, vector<128x256xf32>, vector<2x256xf32> -> vector<2x256xf32>
    %c0_32 = arith.constant 0 : index
    %c0_33 = arith.constant 0 : index
    %53 = vector.load %arg10[%c0_32, %c0_33] : memref<1x256xf32, #tpu.memory_space<vmem>>, vector<1x256xf32>
    %54 = vector.broadcast %53 : vector<1x256xf32> to vector<2x256xf32>
    %55 = arith.addf %52, %54 : vector<2x256xf32>
    %cst_34 = arith.constant 0.000000e+00 : f32
    %56 = vector.broadcast %cst_34 : f32 to vector<2x256xf32>
    %57 = arith.maximumf %55, %56 : vector<2x256xf32>
    %c0_35 = arith.constant 0 : index
    %c0_36 = arith.constant 0 : index
    %58 = vector.load %arg11[%c0_35, %c0_36] : memref<256x128xf32, #tpu.memory_space<vmem>>, vector<256x128xf32>
    %cst_37 = arith.constant dense<0.000000e+00> : vector<2x128xf32>
    %59 = tpu.matmul %57, %58, %cst_37 {dimension_numbers = #tpu.dot_dimension_numbers<[1], [0], [0], [1], [0, 0, 1, 1], [], []>} : vector<2x256xf32>, vector<256x128xf32>, vector<2x128xf32> -> vector<2x128xf32>
    %c0_38 = arith.constant 0 : index
    %c0_39 = arith.constant 0 : index
    %60 = vector.load %arg12[%c0_38, %c0_39] : memref<1x128xf32, #tpu.memory_space<vmem>>, vector<1x128xf32>
    %61 = vector.broadcast %60 : vector<1x128xf32> to vector<2x128xf32>
    %62 = arith.addf %59, %61 : vector<2x128xf32>
    %c0_40 = arith.constant 0 : index
    %c0_41 = arith.constant 0 : index
    %63 = vector.load %arg13[%c0_40, %c0_41] : memref<2x128xf32, #tpu.memory_space<vmem>>, vector<2x128xf32>
    tpu.vector_store %arg13[%c0_40, %c0_41], %62 {strides = array<i32>} : memref<2x128xf32, #tpu.memory_space<vmem>>, vector<2x128xf32>,
    return
  }
  func.func @transform_0(%arg0: i32) -> (i32, i32, i32) {
    %c0_i32 = arith.constant 0 : i32
    %c0_i32_0 = arith.constant 0 : i32
    %c0_i32_1 = arith.constant 0 : i32
    return %arg0, %c0_i32, %c0_i32_0 : i32, i32, i32
  }
  func.func @transform_1(%arg0: i32) -> (i32, i32, i32) {
    %c0_i32 = arith.constant 0 : i32
    %c0_i32_0 = arith.constant 0 : i32
    %c0_i32_1 = arith.constant 0 : i32
    return %arg0, %c0_i32, %c0_i32_0 : i32, i32, i32
  }
  func.func @transform_2(%arg0: i32) -> (i32, i32) {
    %c0_i32 = arith.constant 0 : i32
    %c0_i32_0 = arith.constant 0 : i32
    %c0_i32_1 = arith.constant 0 : i32
    return %c0_i32, %c0_i32_0 : i32, i32
  }
  func.func @transform_3(%arg0: i32) -> (i32, i32) {
    %c0_i32 = arith.constant 0 : i32
    %c0_i32_0 = arith.constant 0 : i32
    %c0_i32_1 = arith.constant 0 : i32
    return %c0_i32, %c0_i32_0 : i32, i32
  }
  func.func @transform_4(%arg0: i32) -> (i32, i32) {
    %c0_i32 = arith.constant 0 : i32
    %c0_i32_0 = arith.constant 0 : i32
    %c0_i32_1 = arith.constant 0 : i32
    return %c0_i32, %c0_i32_0 : i32, i32
  }
  func.func @transform_5(%arg0: i32) -> (i32, i32) {
    %c0_i32 = arith.constant 0 : i32
    %c0_i32_0 = arith.constant 0 : i32
    %c0_i32_1 = arith.constant 0 : i32
    return %c0_i32, %c0_i32_0 : i32, i32
  }
  func.func @transform_6(%arg0: i32) -> (i32, i32) {
    %c0_i32 = arith.constant 0 : i32
    %c0_i32_0 = arith.constant 0 : i32
    %c0_i32_1 = arith.constant 0 : i32
    return %c0_i32, %c0_i32_0 : i32, i32
  }
  func.func @transform_7(%arg0: i32) -> (i32, i32) {
    %c0_i32 = arith.constant 0 : i32
    %c0_i32_0 = arith.constant 0 : i32
    %c0_i32_1 = arith.constant 0 : i32
    return %c0_i32, %c0_i32_0 : i32, i32
  }
  func.func @transform_8(%arg0: i32) -> (i32, i32) {
    %c0_i32 = arith.constant 0 : i32
    %c0_i32_0 = arith.constant 0 : i32
    %c0_i32_1 = arith.constant 0 : i32
    return %c0_i32, %c0_i32_0 : i32, i32
  }
  func.func @transform_9(%arg0: i32) -> (i32, i32) {
    %c0_i32 = arith.constant 0 : i32
    %c0_i32_0 = arith.constant 0 : i32
    %c0_i32_1 = arith.constant 0 : i32
    return %c0_i32, %c0_i32_0 : i32, i32
  }
  func.func @transform_10(%arg0: i32) -> (i32, i32) {
    %c0_i32 = arith.constant 0 : i32
    %c0_i32_0 = arith.constant 0 : i32
    %c0_i32_1 = arith.constant 0 : i32
    return %c0_i32, %c0_i32_0 : i32, i32
  }
  func.func @transform_11(%arg0: i32) -> (i32, i32) {
    %c0_i32 = arith.constant 0 : i32
    %c0_i32_0 = arith.constant 0 : i32
    %c0_i32_1 = arith.constant 0 : i32
    return %c0_i32, %c0_i32_0 : i32, i32
  }
  func.func @transform_12(%arg0: i32) -> (i32, i32) {
    %c0_i32 = arith.constant 0 : i32
    %c0_i32_0 = arith.constant 0 : i32
    return %arg0, %c0_i32 : i32, i32
  }
}

</mosaic_0001>

<llo_original>
// kernel: tpu_custom_call.1
$region0: #{tpu_custom_call.1}
  #allocation0 [shape = 'u32[]', space=smem, size = 0x4, offset = 0x4, fixed_abs, tag = 'smem constant byte address 0x4 - core index']
  #allocation1 [shape = 'u32[144,128]{1,0:T(1,128)}', space=vmem, size = 0x12000, scoped, tag = 'internal scratch']
  %s0 = inlined_call_operand.vmem [shape: f32[1,16,32], index: 0, kind: input, shape index: {}]
  %s1 = inlined_call_operand.vmem [shape: f32[1,2,8], index: 1, kind: input, shape index: {}]
  %s2 = inlined_call_operand.vmem [shape: f32[32,32], index: 2, kind: input, shape index: {}]
  %s3 = inlined_call_operand.vmem [shape: f32[1,32], index: 3, kind: input, shape index: {}]
  %s4 = inlined_call_operand.vmem [shape: f32[32,16], index: 4, kind: input, shape index: {}]
  %s5 = inlined_call_operand.vmem [shape: f32[1,16], index: 5, kind: input, shape index: {}]
  %s6 = inlined_call_operand.vmem [shape: f32[16,4], index: 6, kind: input, shape index: {}]
  %s7 = inlined_call_operand.vmem [shape: f32[1,4], index: 7, kind: input, shape index: {}]
  %s8 = inlined_call_operand.hbm [shape: f32[128,256], index: 8, kind: input, shape index: {}]
  %s9 = inlined_call_operand.vmem [shape: f32[1,256], index: 9, kind: input, shape index: {}]
  %s10 = inlined_call_operand.hbm [shape: f32[256,128], index: 10, kind: input, shape index: {}]
  %s11 = inlined_call_operand.vmem [shape: f32[1,128], index: 11, kind: input, shape index: {}]
  %s12 = inlined_call_operand.hbm [shape: f32[2,128], index: 12, kind: output, shape index: {}]
  %s13 = sld [smem:[#allocation0]]
  $region66: #{tpu_custom_call.1} parent=0
    _
  %s15 = ssub.s32 1, %s13
  %s16 = scalar_select 0, %s15, %s13
  $region1: #{tpu_custom_call.1} parent=0
    #allocation2 [shape = 'u8[131072]{0}', space=vmem, size = 0x20000, scoped, tag = 'input window, operand 8, single buffered']
    #allocation3 [shape = 's32[1]{0}', space=sflag, size = 0x4, scoped, tag = 'scoped memory for tpu_custom_call.1']
    #allocation4 [shape = 's32[1]{0}', space=sflag, size = 0x4, scoped, tag = 'scoped memory for tpu_custom_call.1']
    #allocation5 [shape = 'u8[131072]{0}', space=vmem, size = 0x20000, scoped, tag = 'input window, operand 10, single buffered']
    #allocation6 [shape = 's32[1]{0}', space=sflag, size = 0x4, scoped, tag = 'scoped memory for tpu_custom_call.1']
    #allocation7 [shape = 'u8[1024]{0}', space=vmem, size = 0x400, scoped, tag = 'output window, operand 0, single buffered']
    %17 = vsyncpa [#allocation3], 0
    %18 = vsyncpa [#allocation6], 0
    %19 = vsyncpa [#allocation4], 0
    // Predicated region
    $region2: #{tpu_custom_call.1} parent=1 // pred_check
      _
    $region3: #{tpu_custom_call.1} parent=1 // pred_check_branch
      %21 = sbr.rel (0) target = $region5
    $region4: #{tpu_custom_call.1} parent=1 // pred_region
      _
    $region5: #{tpu_custom_call.1} parent=1 // pred_fallthru
      _
    // Predicated region
    $region6: #{tpu_custom_call.1} parent=1 // pred_check
      _
    $region7: #{tpu_custom_call.1} parent=1 // pred_check_branch
      %23 = sbr.rel (0) target = $region9
    $region8: #{tpu_custom_call.1} parent=1 // pred_region
      _
    $region9: #{tpu_custom_call.1} parent=1 // pred_fallthru
      _
    // Predicated region
    $region10: #{tpu_custom_call.1} parent=1 // pred_check
      _
    $region11: #{tpu_custom_call.1} parent=1 // pred_check_branch
      %25 = sbr.rel (0) target = $region13
    $region12: #{tpu_custom_call.1} parent=1 // pred_region
      _
    $region13: #{tpu_custom_call.1} parent=1 // pred_fallthru
      _
    // Predicated region
    $region14: #{tpu_custom_call.1} parent=1 // pred_check
      _
    $region15: #{tpu_custom_call.1} parent=1 // pred_check_branch
      %27 = sbr.rel (0) target = $region17
    $region16: #{tpu_custom_call.1} parent=1 // pred_region
      _
    $region17: #{tpu_custom_call.1} parent=1 // pred_fallthru
      _
    // Predicated region
    $region18: #{tpu_custom_call.1} parent=1 // pred_check
      _
    $region19: #{tpu_custom_call.1} parent=1 // pred_check_branch
      %29 = sbr.rel (0) target = $region21
    $region20: #{tpu_custom_call.1} parent=1 // pred_region
      _
    $region21: #{tpu_custom_call.1} parent=1 // pred_fallthru
      _
    // Predicated region
    $region22: #{tpu_custom_call.1} parent=1 // pred_check
      _
    $region23: #{tpu_custom_call.1} parent=1 // pred_check_branch
      %31 = sbr.rel (0) target = $region25
    $region24: #{tpu_custom_call.1} parent=1 // pred_region
      _
    $region25: #{tpu_custom_call.1} parent=1 // pred_fallthru
      _
    // Predicated region
    $region26: #{tpu_custom_call.1} parent=1 // pred_check
      _
    $region27: #{tpu_custom_call.1} parent=1 // pred_check_branch
      %33 = sbr.rel (0) target = $region29
    $region28: #{tpu_custom_call.1} parent=1 // pred_region
      _
    $region29: #{tpu_custom_call.1} parent=1 // pred_fallthru
      _
    // Predicated region
    $region30: #{tpu_custom_call.1} parent=1 // pred_check
      _
    $region31: #{tpu_custom_call.1} parent=1 // pred_check_branch
      %35 = sbr.rel (0) target = $region33
    $region32: #{tpu_custom_call.1} parent=1 // pred_region
      _
    $region33: #{tpu_custom_call.1} parent=1 // pred_fallthru
      _
    // Predicated region
    $region34: #{tpu_custom_call.1} parent=1 // pred_check
      _
    $region35: #{tpu_custom_call.1} parent=1 // pred_check_branch
      %37 = sbr.rel (0) target = $region37
    $region36: #{tpu_custom_call.1} parent=1 // pred_region
      %s39 = ssub.s32 4096, 4096
      %40 = vsyncadd [#allocation3], %s39
      %s41 = sshll.u32 [#allocation2], 4
      %s42 = int_to_ptr.vmem [resolvable:$true] %s41
      %47 = dma.hbm_to_vmem [thread:$0]  %s8, 4096, %s42, [#allocation3], 256, 256, 16
    $region37: #{tpu_custom_call.1} parent=1 // pred_fallthru
      _
    // Predicated region
    $region38: #{tpu_custom_call.1} parent=1 // pred_check
      _
    $region39: #{tpu_custom_call.1} parent=1 // pred_check_branch
      %49 = sbr.rel (0) target = $region41
    $region40: #{tpu_custom_call.1} parent=1 // pred_region
      _
    $region41: #{tpu_custom_call.1} parent=1 // pred_fallthru
      _
    // Predicated region
    $region42: #{tpu_custom_call.1} parent=1 // pred_check
      _
    $region43: #{tpu_custom_call.1} parent=1 // pred_check_branch
      %51 = sbr.rel (0) target = $region45
    $region44: #{tpu_custom_call.1} parent=1 // pred_region
      %s53 = ssub.s32 4096, 4096
      %54 = vsyncadd [#allocation6], %s53
      %s55 = sshll.u32 [#allocation5], 4
      %s56 = int_to_ptr.vmem [resolvable:$true] %s55
      %61 = dma.hbm_to_vmem [thread:$0]  %s10, 4096, %s56, [#allocation6], 128, 128, 8
    $region45: #{tpu_custom_call.1} parent=1 // pred_fallthru
      _
    // Predicated region
    $region46: #{tpu_custom_call.1} parent=1 // pred_check
      _
    $region47: #{tpu_custom_call.1} parent=1 // pred_check_branch
      %63 = sbr.rel (0) target = $region49
    $region48: #{tpu_custom_call.1} parent=1 // pred_region
      _
    $region49: #{tpu_custom_call.1} parent=1 // pred_fallthru
      _
    // Predicated region
    $region50: #{tpu_custom_call.1} parent=1 // pred_check
      _
    $region51: #{tpu_custom_call.1} parent=1 // pred_check_branch
      %65 = sbr.rel (0) target = $region53
    $region52: #{tpu_custom_call.1} parent=1 // pred_region
      %66 = dma.done [#allocation3], 4096
    $region53: #{tpu_custom_call.1} parent=1 // pred_fallthru
      _
    // Predicated region
    $region54: #{tpu_custom_call.1} parent=1 // pred_check
      _
    $region55: #{tpu_custom_call.1} parent=1 // pred_check_branch
      %68 = sbr.rel (0) target = $region57
    $region56: #{tpu_custom_call.1} parent=1 // pred_region
      %69 = dma.done [#allocation6], 4096
    $region57: #{tpu_custom_call.1} parent=1 // pred_fallthru
      _
    %v70 = vld [vmem:[%s0] sm:$0xff]
    %v71 = vld [vmem:[%s0 + $0x8] sm:$0xff]
    %v72 = vld [vmem:[%s2] sm:$0xff]
    %v73 = vld [vmem:[%s2 + $0x8] sm:$0xff]
    %v74 = vld [vmem:[%s2 + $0x10] sm:$0xff]
    %v75 = vld [vmem:[%s2 + $0x18] sm:$0xff]
    %v76 = vld [vmem:[%s3] sm:$0x1]
    %v78 = vlaneseq
    %v79 = vshrl.u32 %v78, 7
    %v80 = vsub.s32 0, %v79
    %v81 = vrot.slane %v76, %v80
    %vm83 = vcmask 261120
    %v85 = vsel %vm83, %v70, 0
    %v88 = vsel %vm83, %v71, 0
    %90 = vmatprep.subr.mxu0 0.0
    %91 = vmatpush1.msra.mxu0 0.0
    %92 = vmatprep.subr.mxu0 0.0
    %93 = vmatpush1.msra.mxu0 0.0
    %94 = vmatprep.subr.mxu0 0.0
    %95 = vmatpush1.msra.mxu0 0.0
    %96 = vmatprep.subr.mxu0 0.0
    %97 = vmatpush1.msra.mxu0 0.0
    %98 = vmatprep.subr.mxu0 0.0
    %99 = vmatpush1.msra.mxu0 0.0
    %100 = vmatprep.subr.mxu0 0.0
    %101 = vmatpush1.msra.mxu0 0.0
    %102 = vmatprep.subr.mxu0 0.0
    %103 = vmatpush1.msra.mxu0 0.0
    %104 = vmatprep.subr.mxu0 0.0
    %105 = vmatpush1.msra.mxu0 0.0
    %106 = vmatprep.subr.mxu0 0.0
    %107 = vmatpush1.msra.mxu0 0.0
    %108 = vmatprep.subr.mxu0 0.0
    %109 = vmatpush1.msra.mxu0 0.0
    %110 = vmatprep.subr.mxu0 0.0
    %111 = vmatpush1.msra.mxu0 0.0
    %112 = vmatprep.subr.mxu0 0.0
    %113 = vmatpush1.msra.mxu0 0.0
    %114 = vmatprep.subr.mxu0 0.0
    %115 = vmatpush1.msra.mxu0 %v75
    %116 = vmatprep.subr.mxu0 0.0
    %117 = vmatpush1.msra.mxu0 %v74
    %118 = vmatprep.subr.mxu0 0.0
    %119 = vmatpush1.msra.mxu0 %v73
    %120 = vmatprep.subr.mxu0 0.0
    %121 = vmatpush1.msra.mxu0 %v72
    %122 = vmatprep.subr.mxu0 0.0
    %123 = vmatpush2.msra.mxu0 0.0
    %124 = vmatprep.subr.mxu0 0.0
    %125 = vmatpush2.msra.mxu0 0.0
    %126 = vmatprep.subr.mxu0 0.0
    %127 = vmatpush2.msra.mxu0 0.0
    %128 = vmatprep.subr.mxu0 0.0
    %129 = vmatpush2.msra.mxu0 0.0
    %130 = vmatprep.subr.mxu0 0.0
    %131 = vmatpush2.msra.mxu0 0.0
    %132 = vmatprep.subr.mxu0 0.0
    %133 = vmatpush2.msra.mxu0 0.0
    %134 = vmatprep.subr.mxu0 0.0
    %135 = vmatpush2.msra.mxu0 0.0
    %136 = vmatprep.subr.mxu0 0.0
    %137 = vmatpush2.msra.mxu0 0.0
    %138 = vmatprep.subr.mxu0 0.0
    %139 = vmatpush2.msra.mxu0 0.0
    %140 = vmatprep.subr.mxu0 0.0
    %141 = vmatpush2.msra.mxu0 0.0
    %142 = vmatprep.subr.mxu0 0.0
    %143 = vmatpush2.msra.mxu0 0.0
    %144 = vmatprep.subr.mxu0 0.0
    %145 = vmatpush2.msra.mxu0 0.0
    %146 = vmatprep.subr.mxu0 0.0
    %147 = vmatpush2.msra.mxu0 0.0
    %148 = vmatprep.subr.mxu0 0.0
    %149 = vmatpush2.msra.mxu0 0.0
    %150 = vmatprep.subr.mxu0 0.0
    %151 = vmatpush2.msra.mxu0 0.0
    %152 = vmatprep.subr.mxu0 0.0
    %153 = vmatpush2.msra.mxu0 0.0
    %154 = vmatprep.mubr.f32.mxu0 0.0
    %155 = vmatmul.mubr.f32.gmra.mxu0 %v85
    %v156 = vpop.f32.mrf.mxu0
    %v157 = vadd.f32 %v81, %v156
    %v158 = vpop.f32.mrf.mxu0
    %159 = vmatprep.mubr.f32.mxu0 0.0
    %160 = vmatmul.mubr.f32.gmra.mxu0 %v88
    %v161 = vpop.f32.mrf.mxu0
    %v162 = vadd.f32 %v81, %v161
    %v163 = vpop.f32.mrf.mxu0
    %164 = vdwg.mxu0
    %v165 = vmax.f32 %v157, 0.0
    %v166 = vmax.f32 %v162, 0.0
    %v167 = vld [vmem:[%s4] sm:$0xff]
    %v168 = vld [vmem:[%s4 + $0x8] sm:$0xff]
    %v169 = vld [vmem:[%s4 + $0x10] sm:$0xff]
    %v170 = vld [vmem:[%s4 + $0x18] sm:$0xff]
    %v171 = vld [vmem:[%s5] sm:$0x1]
    %v173 = vlaneseq
    %v174 = vshrl.u32 %v173, 7
    %v175 = vsub.s32 0, %v174
    %v176 = vrot.slane %v171, %v175
    %v179 = vsel %vm83, %v165, 0
    %v182 = vsel %vm83, %v166, 0
    %184 = vmatprep.subr.mxu0 0.0
    %185 = vmatpush1.msra.mxu0 0.0
    %186 = vmatprep.subr.mxu0 0.0
    %187 = vmatpush1.msra.mxu0 0.0
    %188 = vmatprep.subr.mxu0 0.0
    %189 = vmatpush1.msra.mxu0 0.0
    %190 = vmatprep.subr.mxu0 0.0
    %191 = vmatpush1.msra.mxu0 0.0
    %192 = vmatprep.subr.mxu0 0.0
    %193 = vmatpush1.msra.mxu0 0.0
    %194 = vmatprep.subr.mxu0 0.0
    %195 = vmatpush1.msra.mxu0 0.0
    %196 = vmatprep.subr.mxu0 0.0
    %197 = vmatpush1.msra.mxu0 0.0
    %198 = vmatprep.subr.mxu0 0.0
    %199 = vmatpush1.msra.mxu0 0.0
    %200 = vmatprep.subr.mxu0 0.0
    %201 = vmatpush1.msra.mxu0 0.0
    %202 = vmatprep.subr.mxu0 0.0
    %203 = vmatpush1.msra.mxu0 0.0
    %204 = vmatprep.subr.mxu0 0.0
    %205 = vmatpush1.msra.mxu0 0.0
    %206 = vmatprep.subr.mxu0 0.0
    %207 = vmatpush1.msra.mxu0 0.0
    %208 = vmatprep.subr.mxu0 0.0
    %209 = vmatpush1.msra.mxu0 %v170
    %210 = vmatprep.subr.mxu0 0.0
    %211 = vmatpush1.msra.mxu0 %v169
    %212 = vmatprep.subr.mxu0 0.0
    %213 = vmatpush1.msra.mxu0 %v168
    %214 = vmatprep.subr.mxu0 0.0
    %215 = vmatpush1.msra.mxu0 %v167
    %216 = vmatprep.subr.mxu0 0.0
    %217 = vmatpush2.msra.mxu0 0.0
    %218 = vmatprep.subr.mxu0 0.0
    %219 = vmatpush2.msra.mxu0 0.0
    %220 = vmatprep.subr.mxu0 0.0
    %221 = vmatpush2.msra.mxu0 0.0
    %222 = vmatprep.subr.mxu0 0.0
    %223 = vmatpush2.msra.mxu0 0.0
    %224 = vmatprep.subr.mxu0 0.0
    %225 = vmatpush2.msra.mxu0 0.0
    %226 = vmatprep.subr.mxu0 0.0
    %227 = vmatpush2.msra.mxu0 0.0
    %228 = vmatprep.subr.mxu0 0.0
    %229 = vmatpush2.msra.mxu0 0.0
    %230 = vmatprep.subr.mxu0 0.0
    %231 = vmatpush2.msra.mxu0 0.0
    %232 = vmatprep.subr.mxu0 0.0
    %233 = vmatpush2.msra.mxu0 0.0
    %234 = vmatprep.subr.mxu0 0.0
    %235 = vmatpush2.msra.mxu0 0.0
    %236 = vmatprep.subr.mxu0 0.0
    %237 = vmatpush2.msra.mxu0 0.0
    %238 = vmatprep.subr.mxu0 0.0
    %239 = vmatpush2.msra.mxu0 0.0
    %240 = vmatprep.subr.mxu0 0.0
    %241 = vmatpush2.msra.mxu0 0.0
    %242 = vmatprep.subr.mxu0 0.0
    %243 = vmatpush2.msra.mxu0 0.0
    %244 = vmatprep.subr.mxu0 0.0
    %245 = vmatpush2.msra.mxu0 0.0
    %246 = vmatprep.subr.mxu0 0.0
    %247 = vmatpush2.msra.mxu0 0.0
    %248 = vmatprep.mubr.f32.mxu0 0.0
    %249 = vmatmul.mubr.f32.gmra.mxu0 %v179
    %v250 = vpop.f32.mrf.mxu0
    %v251 = vadd.f32 %v176, %v250
    %v252 = vpop.f32.mrf.mxu0
    %253 = vmatprep.mubr.f32.mxu0 0.0
    %254 = vmatmul.mubr.f32.gmra.mxu0 %v182
    %v255 = vpop.f32.mrf.mxu0
    %v256 = vadd.f32 %v176, %v255
    %v257 = vpop.f32.mrf.mxu0
    %258 = vdwg.mxu0
    %v259 = vmul.f32 %v251, 0.5
    %v260 = vmul.f32 %v256, 0.5
    %v261 = vmul.f32 %v251, 0.70710677
    %v262 = vmul.f32 %v256, 0.70710677
    %v263 = verf.f32.pop %v261
    %v264 = verf.f32.pop %v262
    %v265 = vadd.f32 %v263, 1.0
    %v266 = vadd.f32 %v264, 1.0
    %v267 = vmul.f32 %v259, %v265
    %v268 = vmul.f32 %v260, %v266
    %v269 = vld [vmem:[%s6] sm:$0xff]
    %v270 = vld [vmem:[%s6 + $0x8] sm:$0xff]
    %v271 = vld [vmem:[%s7] sm:$0x1]
    %v273 = vlaneseq
    %v274 = vshrl.u32 %v273, 7
    %v275 = vsub.s32 0, %v274
    %v276 = vrot.slane %v271, %v275
    %vm278 = vcmask 130048
    %v280 = vsel %vm278, %v267, 0
    %v283 = vsel %vm278, %v268, 0
    %285 = vmatprep.subr.mxu0 0.0
    %286 = vmatpush1.msra.mxu0 0.0
    %287 = vmatprep.subr.mxu0 0.0
    %288 = vmatpush1.msra.mxu0 0.0
    %289 = vmatprep.subr.mxu0 0.0
    %290 = vmatpush1.msra.mxu0 0.0
    %291 = vmatprep.subr.mxu0 0.0
    %292 = vmatpush1.msra.mxu0 0.0
    %293 = vmatprep.subr.mxu0 0.0
    %294 = vmatpush1.msra.mxu0 0.0
    %295 = vmatprep.subr.mxu0 0.0
    %296 = vmatpush1.msra.mxu0 0.0
    %297 = vmatprep.subr.mxu0 0.0
    %298 = vmatpush1.msra.mxu0 0.0
    %299 = vmatprep.subr.mxu0 0.0
    %300 = vmatpush1.msra.mxu0 0.0
    %301 = vmatprep.subr.mxu0 0.0
    %302 = vmatpush1.msra.mxu0 0.0
    %303 = vmatprep.subr.mxu0 0.0
    %304 = vmatpush1.msra.mxu0 0.0
    %305 = vmatprep.subr.mxu0 0.0
    %306 = vmatpush1.msra.mxu0 0.0
    %307 = vmatprep.subr.mxu0 0.0
    %308 = vmatpush1.msra.mxu0 0.0
    %309 = vmatprep.subr.mxu0 0.0
    %310 = vmatpush1.msra.mxu0 0.0
    %311 = vmatprep.subr.mxu0 0.0
    %312 = vmatpush1.msra.mxu0 0.0
    %313 = vmatprep.subr.mxu0 0.0
    %314 = vmatpush1.msra.mxu0 %v270
    %315 = vmatprep.subr.mxu0 0.0
    %316 = vmatpush1.msra.mxu0 %v269
    %317 = vmatprep.subr.mxu0 0.0
    %318 = vmatpush2.msra.mxu0 0.0
    %319 = vmatprep.subr.mxu0 0.0
    %320 = vmatpush2.msra.mxu0 0.0
    %321 = vmatprep.subr.mxu0 0.0
    %322 = vmatpush2.msra.mxu0 0.0
    %323 = vmatprep.subr.mxu0 0.0
    %324 = vmatpush2.msra.mxu0 0.0
    %325 = vmatprep.subr.mxu0 0.0
    %326 = vmatpush2.msra.mxu0 0.0
    %327 = vmatprep.subr.mxu0 0.0
    %328 = vmatpush2.msra.mxu0 0.0
    %329 = vmatprep.subr.mxu0 0.0
    %330 = vmatpush2.msra.mxu0 0.0
    %331 = vmatprep.subr.mxu0 0.0
    %332 = vmatpush2.msra.mxu0 0.0
    %333 = vmatprep.subr.mxu0 0.0
    %334 = vmatpush2.msra.mxu0 0.0
    %335 = vmatprep.subr.mxu0 0.0
    %336 = vmatpush2.msra.mxu0 0.0
    %337 = vmatprep.subr.mxu0 0.0
    %338 = vmatpush2.msra.mxu0 0.0
    %339 = vmatprep.subr.mxu0 0.0
    %340 = vmatpush2.msra.mxu0 0.0
    %341 = vmatprep.subr.mxu0 0.0
    %342 = vmatpush2.msra.mxu0 0.0
    %343 = vmatprep.subr.mxu0 0.0
    %344 = vmatpush2.msra.mxu0 0.0
    %345 = vmatprep.subr.mxu0 0.0
    %346 = vmatpush2.msra.mxu0 0.0
    %347 = vmatprep.subr.mxu0 0.0
    %348 = vmatpush2.msra.mxu0 0.0
    %349 = vmatprep.mubr.f32.mxu0 0.0
    %350 = vmatmul.mubr.f32.gmra.mxu0 %v280
    %v351 = vpop.f32.mrf.mxu0
    %v352 = vadd.f32 %v276, %v351
    %v353 = vpop.f32.mrf.mxu0
    %354 = vmatprep.mubr.f32.mxu0 0.0
    %355 = vmatmul.mubr.f32.gmra.mxu0 %v283
    %v356 = vpop.f32.mrf.mxu0
    %v357 = vadd.f32 %v276, %v356
    %v358 = vpop.f32.mrf.mxu0
    %359 = vdwg.mxu0
    %v360 = vld [vmem:[%s1] sm:$0x3]
    %v361 = vlaneseq
    %v362 = vshrl.u32 %v361, 7
    %v363 = vsub.s32 0, %v362
    %v364 = vrot.slane %v360, %v363
    %366 = vbcast.lane.b32.xlu0 %v364, 256
    %v367 = vpop.permute.xlu0 %366
    %v368 = vlaneseq
    %v369 = vshrl.u32 %v368, 7
    %v370 = vsub.s32 1, %v369
    %v371 = vrot.slane %v360, %v370
    %373 = vbcast.lane.b32.xlu0 %v371, 256
    %v374 = vpop.permute.xlu0 %373
    %vm375 = vcmp.gt.f32.partialorder %v367, 0.5
    %vm376 = vcmp.gt.f32.partialorder %v374, 0.5
    %v377 = vsel %vm375, 1, 0
    %v378 = vsel %vm376, 1, 0
    %vm379 = vcmp.eq.s32.totalorder %v377, 1
    %vm380 = vcmp.eq.s32.totalorder %v378, 1
    %v381 = vsel %vm379, %v352, -inf
    %v382 = vsel %vm380, %v357, -inf
    %vm383 = vcmask 31744
    %v384 = vsel %vm383, %v381, -inf
    %v385 = vrot.slane %v384, 4
    %v386 = vmax.f32 %v384, %v385
    %v387 = vrot.slane %v386, 2
    %v388 = vmax.f32 %v386, %v387
    %v389 = vrot.slane %v388, 1
    %v390 = vmax.f32 %v388, %v389
    %v391 = vsel %vm383, %v382, -inf
    %v392 = vrot.slane %v391, 4
    %v393 = vmax.f32 %v391, %v392
    %v394 = vrot.slane %v393, 2
    %v395 = vmax.f32 %v393, %v394
    %v396 = vrot.slane %v395, 1
    %v397 = vmax.f32 %v395, %v396
    %v398 = vsub.f32 %v381, %v390
    %v399 = vsub.f32 %v382, %v397
    %v400 = vmul.f32 %v398, 1.442695
    %v401 = vpow.pop %v400
    %v402 = vmul.f32 %v399, 1.442695
    %v403 = vpow.pop %v402
    %v404 = vsel %vm383, %v401, 0.0
    %v405 = vrot.slane %v404, 4
    %v406 = vadd.f32 %v404, %v405
    %v407 = vrot.slane %v406, 2
    %v408 = vadd.f32 %v406, %v407
    %v409 = vrot.slane %v408, 1
    %v410 = vadd.f32 %v408, %v409
    %v411 = vsel %vm383, %v403, 0.0
    %v412 = vrot.slane %v411, 4
    %v413 = vadd.f32 %v411, %v412
    %v414 = vrot.slane %v413, 2
    %v415 = vadd.f32 %v413, %v414
    %v416 = vrot.slane %v415, 1
    %v417 = vadd.f32 %v415, %v416
    %v418 = vrcp.pop %v410
    %v419 = vmul.f32 %v401, %v418
    %v420 = vrcp.pop %v417
    %v421 = vmul.f32 %v403, %v420
    %422 = vxpose.xlu0.b32.start [1/16] %v419, 128
    %423 = vxpose.xlu0.b32.cont [2/16] 0.0, 128
    %424 = vxpose.xlu0.b32.cont [3/16] 0.0, 128
    %425 = vxpose.xlu0.b32.cont [4/16] 0.0, 128
    %426 = vxpose.xlu0.b32.cont [5/16] 0.0, 128
    %427 = vxpose.xlu0.b32.cont [6/16] 0.0, 128
    %428 = vxpose.xlu0.b32.cont [7/16] 0.0, 128
    %429 = vxpose.xlu0.b32.cont [8/16] 0.0, 128
    %430 = vxpose.xlu0.b32.cont [9/16] 0.0, 128
    %431 = vxpose.xlu0.b32.cont [10/16] 0.0, 128
    %432 = vxpose.xlu0.b32.cont [11/16] 0.0, 128
    %433 = vxpose.xlu0.b32.cont [12/16] 0.0, 128
    %434 = vxpose.xlu0.b32.cont [13/16] 0.0, 128
    %435 = vxpose.xlu0.b32.cont [14/16] 0.0, 128
    %436 = vxpose.xlu0.b32.cont [15/16] 0.0, 128
    %437 = vxpose.xlu0.b32.end [16/16] 0.0, 128
    %v438 = vpop.trf.xlu0
    %v439 = vpop.trf.xlu0
    %v440 = vpop.trf.xlu0
    %v441 = vpop.trf.xlu0
    %v442 = vpop.trf.xlu0
    %v443 = vpop.trf.xlu0
    %v444 = vpop.trf.xlu0
    %v445 = vpop.trf.xlu0
    %v446 = vpop.trf.xlu0
    %v447 = vpop.trf.xlu0
    %v448 = vpop.trf.xlu0
    %v449 = vpop.trf.xlu0
    %v450 = vpop.trf.xlu0
    %v451 = vpop.trf.xlu0
    %v452 = vpop.trf.xlu0
    %v453 = vpop.trf.xlu0
    %vm454 = vcmask 64512
    %v456 = vsel %vm454, %v438, 0
    %458 = vmatprep.subr.mxu0 0.0
    %459 = vmatpush1.msra.mxu0 0.0
    %460 = vmatprep.subr.mxu0 0.0
    %461 = vmatpush1.msra.mxu0 0.0
    %462 = vmatprep.subr.mxu0 0.0
    %463 = vmatpush1.msra.mxu0 0.0
    %464 = vmatprep.subr.mxu0 0.0
    %465 = vmatpush1.msra.mxu0 0.0
    %466 = vmatprep.subr.mxu0 0.0
    %467 = vmatpush1.msra.mxu0 0.0
    %468 = vmatprep.subr.mxu0 0.0
    %469 = vmatpush1.msra.mxu0 0.0
    %470 = vmatprep.subr.mxu0 0.0
    %471 = vmatpush1.msra.mxu0 0.0
    %472 = vmatprep.subr.mxu0 0.0
    %473 = vmatpush1.msra.mxu0 0.0
    %474 = vmatprep.subr.mxu0 0.0
    %475 = vmatpush1.msra.mxu0 0.0
    %476 = vmatprep.subr.mxu0 0.0
    %477 = vmatpush1.msra.mxu0 0.0
    %478 = vmatprep.subr.mxu0 0.0
    %479 = vmatpush1.msra.mxu0 0.0
    %480 = vmatprep.subr.mxu0 0.0
    %481 = vmatpush1.msra.mxu0 0.0
    %482 = vmatprep.subr.mxu0 0.0
    %483 = vmatpush1.msra.mxu0 0.0
    %484 = vmatprep.subr.mxu0 0.0
    %485 = vmatpush1.msra.mxu0 0.0
    %486 = vmatprep.subr.mxu0 0.0
    %487 = vmatpush1.msra.mxu0 0.0
    %488 = vmatprep.subr.mxu0 0.0
    %489 = vmatpush1.msra.mxu0 %v165
    %490 = vmatprep.subr.mxu0 0.0
    %491 = vmatpush2.msra.mxu0 0.0
    %492 = vmatprep.subr.mxu0 0.0
    %493 = vmatpush2.msra.mxu0 0.0
    %494 = vmatprep.subr.mxu0 0.0
    %495 = vmatpush2.msra.mxu0 0.0
    %496 = vmatprep.subr.mxu0 0.0
    %497 = vmatpush2.msra.mxu0 0.0
    %498 = vmatprep.subr.mxu0 0.0
    %499 = vmatpush2.msra.mxu0 0.0
    %500 = vmatprep.subr.mxu0 0.0
    %501 = vmatpush2.msra.mxu0 0.0
    %502 = vmatprep.subr.mxu0 0.0
    %503 = vmatpush2.msra.mxu0 0.0
    %504 = vmatprep.subr.mxu0 0.0
    %505 = vmatpush2.msra.mxu0 0.0
    %506 = vmatprep.subr.mxu0 0.0
    %507 = vmatpush2.msra.mxu0 0.0
    %508 = vmatprep.subr.mxu0 0.0
    %509 = vmatpush2.msra.mxu0 0.0
    %510 = vmatprep.subr.mxu0 0.0
    %511 = vmatpush2.msra.mxu0 0.0
    %512 = vmatprep.subr.mxu0 0.0
    %513 = vmatpush2.msra.mxu0 0.0
    %514 = vmatprep.subr.mxu0 0.0
    %515 = vmatpush2.msra.mxu0 0.0
    %516 = vmatprep.subr.mxu0 0.0
    %517 = vmatpush2.msra.mxu0 0.0
    %518 = vmatprep.subr.mxu0 0.0
    %519 = vmatpush2.msra.mxu0 0.0
    %520 = vmatprep.subr.mxu0 0.0
    %521 = vmatpush2.msra.mxu0 0.0
    %522 = vmatprep.mubr.f32.mxu0 0.0
    %523 = vmatmul.mubr.f32.gmra.mxu0 %v456
    %v524 = vpop.f32.mrf.mxu0
    %v525 = vadd.f32 0.0, %v524
    %v526 = vpop.f32.mrf.mxu0
    %527 = vdwg.mxu0
    %528 = vxpose.xlu0.b32.start [1/16] %v421, 128
    %529 = vxpose.xlu0.b32.cont [2/16] 0.0, 128
    %530 = vxpose.xlu0.b32.cont [3/16] 0.0, 128
    %531 = vxpose.xlu0.b32.cont [4/16] 0.0, 128
    %532 = vxpose.xlu0.b32.cont [5/16] 0.0, 128
    %533 = vxpose.xlu0.b32.cont [6/16] 0.0, 128
    %534 = vxpose.xlu0.b32.cont [7/16] 0.0, 128
    %535 = vxpose.xlu0.b32.cont [8/16] 0.0, 128
    %536 = vxpose.xlu0.b32.cont [9/16] 0.0, 128
    %537 = vxpose.xlu0.b32.cont [10/16] 0.0, 128
    %538 = vxpose.xlu0.b32.cont [11/16] 0.0, 128
    %539 = vxpose.xlu0.b32.cont [12/16] 0.0, 128
    %540 = vxpose.xlu0.b32.cont [13/16] 0.0, 128
    %541 = vxpose.xlu0.b32.cont [14/16] 0.0, 128
    %542 = vxpose.xlu0.b32.cont [15/16] 0.0, 128
    %543 = vxpose.xlu0.b32.end [16/16] 0.0, 128
    %v544 = vpop.trf.xlu0
    %v545 = vpop.trf.xlu0
    %v546 = vpop.trf.xlu0
    %v547 = vpop.trf.xlu0
    %v548 = vpop.trf.xlu0
    %v549 = vpop.trf.xlu0
    %v550 = vpop.trf.xlu0
    %v551 = vpop.trf.xlu0
    %v552 = vpop.trf.xlu0
    %v553 = vpop.trf.xlu0
    %v554 = vpop.trf.xlu0
    %v555 = vpop.trf.xlu0
    %v556 = vpop.trf.xlu0
    %v557 = vpop.trf.xlu0
    %v558 = vpop.trf.xlu0
    %v559 = vpop.trf.xlu0
    %v561 = vsel %vm454, %v544, 0
    %563 = vmatprep.subr.mxu0 0.0
    %564 = vmatpush1.msra.mxu0 0.0
    %565 = vmatprep.subr.mxu0 0.0
    %566 = vmatpush1.msra.mxu0 0.0
    %567 = vmatprep.subr.mxu0 0.0
    %568 = vmatpush1.msra.mxu0 0.0
    %569 = vmatprep.subr.mxu0 0.0
    %570 = vmatpush1.msra.mxu0 0.0
    %571 = vmatprep.subr.mxu0 0.0
    %572 = vmatpush1.msra.mxu0 0.0
    %573 = vmatprep.subr.mxu0 0.0
    %574 = vmatpush1.msra.mxu0 0.0
    %575 = vmatprep.subr.mxu0 0.0
    %576 = vmatpush1.msra.mxu0 0.0
    %577 = vmatprep.subr.mxu0 0.0
    %578 = vmatpush1.msra.mxu0 0.0
    %579 = vmatprep.subr.mxu0 0.0
    %580 = vmatpush1.msra.mxu0 0.0
    %581 = vmatprep.subr.mxu0 0.0
    %582 = vmatpush1.msra.mxu0 0.0
    %583 = vmatprep.subr.mxu0 0.0
    %584 = vmatpush1.msra.mxu0 0.0
    %585 = vmatprep.subr.mxu0 0.0
    %586 = vmatpush1.msra.mxu0 0.0
    %587 = vmatprep.subr.mxu0 0.0
    %588 = vmatpush1.msra.mxu0 0.0
    %589 = vmatprep.subr.mxu0 0.0
    %590 = vmatpush1.msra.mxu0 0.0
    %591 = vmatprep.subr.mxu0 0.0
    %592 = vmatpush1.msra.mxu0 0.0
    %593 = vmatprep.subr.mxu0 0.0
    %594 = vmatpush1.msra.mxu0 %v166
    %595 = vmatprep.subr.mxu0 0.0
    %596 = vmatpush2.msra.mxu0 0.0
    %597 = vmatprep.subr.mxu0 0.0
    %598 = vmatpush2.msra.mxu0 0.0
    %599 = vmatprep.subr.mxu0 0.0
    %600 = vmatpush2.msra.mxu0 0.0
    %601 = vmatprep.subr.mxu0 0.0
    %602 = vmatpush2.msra.mxu0 0.0
    %603 = vmatprep.subr.mxu0 0.0
    %604 = vmatpush2.msra.mxu0 0.0
    %605 = vmatprep.subr.mxu0 0.0
    %606 = vmatpush2.msra.mxu0 0.0
    %607 = vmatprep.subr.mxu0 0.0
    %608 = vmatpush2.msra.mxu0 0.0
    %609 = vmatprep.subr.mxu0 0.0
    %610 = vmatpush2.msra.mxu0 0.0
    %611 = vmatprep.subr.mxu0 0.0
    %612 = vmatpush2.msra.mxu0 0.0
    %613 = vmatprep.subr.mxu0 0.0
    %614 = vmatpush2.msra.mxu0 0.0
    %615 = vmatprep.subr.mxu0 0.0
    %616 = vmatpush2.msra.mxu0 0.0
    %617 = vmatprep.subr.mxu0 0.0
    %618 = vmatpush2.msra.mxu0 0.0
    %619 = vmatprep.subr.mxu0 0.0
    %620 = vmatpush2.msra.mxu0 0.0
    %621 = vmatprep.subr.mxu0 0.0
    %622 = vmatpush2.msra.mxu0 0.0
    %623 = vmatprep.subr.mxu0 0.0
    %624 = vmatpush2.msra.mxu0 0.0
    %625 = vmatprep.subr.mxu0 0.0
    %626 = vmatpush2.msra.mxu0 0.0
    %627 = vmatprep.mubr.f32.mxu0 0.0
    %628 = vmatmul.mubr.f32.gmra.mxu0 %v561
    %v629 = vpop.f32.mrf.mxu0
    %v630 = vadd.f32 0.0, %v629
    %v631 = vpop.f32.mrf.mxu0
    %632 = vdwg.mxu0
    %v634 = vunpack.c.l.s4 1983009808
    %v635 = vunpack.c.0.s8 %v634
    %v636 = vlaneseq
    %v637 = vshrl.u32 %v636, 7
    %v638 = vsub.s32 %v635, %v637
    %v639 = vrot.slane %v525, %v638
    %v641 = vunpack.c.l.s4 1983009808
    %v642 = vunpack.c.0.s8 %v641
    %v643 = vlaneseq
    %v644 = vshrl.u32 %v643, 7
    %v645 = vsub.s32 %v642, %v644
    %v646 = vrot.slane %v630, %v645
    %v647 = vcombine.low %v639, %v646
    %v648 = vcombine.high %v639, %v646
    %v650 = vunpack.c.l.s4 1934713408
    %v651 = vunpack.c.0.s8 %v650
    %v652 = vlaneseq
    %v653 = vshrl.u32 %v652, 7
    %v654 = vsub.s32 %v651, %v653
    %v655 = vrot.slane %v647, %v654
    %v657 = vunpack.c.l.s4 1934713408
    %v658 = vunpack.c.0.s8 %v657
    %v659 = vlaneseq
    %v660 = vshrl.u32 %v659, 7
    %v661 = vsub.s32 %v658, %v660
    %v662 = vrot.slane %v648, %v661
    %v663 = vcombine.high %v655, 0.0
    %v664 = vcombine.high %v662, 0.0
    %666 = vrot.lane.b32.xlu0 %v663, 32
    %v667 = vpop.permute.xlu0 %666
    %670 = vrot.lane.b32.xlu0 %v662, 64
    %v671 = vpop.permute.xlu0 %670
    %674 = vrot.lane.b32.xlu0 %v664, 96
    %v675 = vpop.permute.xlu0 %674
    %v677 = vsel %vm83, %v655, %v667
    %vm678 = vcmask 523264
    %v679 = vsel %vm678, %v677, %v671
    %vm680 = vcmask 785408
    %v681 = vsel %vm680, %v679, %v675
    %v682 = vld [vmem:[#allocation2] sm:$0xff]
    %v683 = vld [vmem:[#allocation2 + $0x8] sm:$0xff]
    %v684 = vld [vmem:[#allocation2 + $0x10] sm:$0xff]
    %v685 = vld [vmem:[#allocation2 + $0x18] sm:$0xff]
    %v686 = vld [vmem:[#allocation2 + $0x20] sm:$0xff]
    %v687 = vld [vmem:[#allocation2 + $0x28] sm:$0xff]
    %v688 = vld [vmem:[#allocation2 + $0x30] sm:$0xff]
    %v689 = vld [vmem:[#allocation2 + $0x38] sm:$0xff]
    %v690 = vld [vmem:[#allocation2 + $0x40] sm:$0xff]
    %v691 = vld [vmem:[#allocation2 + $0x48] sm:$0xff]
    %v692 = vld [vmem:[#allocation2 + $0x50] sm:$0xff]
    %v693 = vld [vmem:[#allocation2 + $0x58] sm:$0xff]
    %v694 = vld [vmem:[#allocation2 + $0x60] sm:$0xff]
    %v695 = vld [vmem:[#allocation2 + $0x68] sm:$0xff]
    %v696 = vld [vmem:[#allocation2 + $0x70] sm:$0xff]
    %v697 = vld [vmem:[#allocation2 + $0x78] sm:$0xff]
    %v698 = vld [vmem:[#allocation2 + $0x80] sm:$0xff]
    %v699 = vld [vmem:[#allocation2 + $0x88] sm:$0xff]
    %v700 = vld [vmem:[#allocation2 + $0x90] sm:$0xff]
    %v701 = vld [vmem:[#allocation2 + $0x98] sm:$0xff]
    %v702 = vld [vmem:[#allocation2 + $0xa0] sm:$0xff]
    %v703 = vld [vmem:[#allocation2 + $0xa8] sm:$0xff]
    %v704 = vld [vmem:[#allocation2 + $0xb0] sm:$0xff]
    %v705 = vld [vmem:[#allocation2 + $0xb8] sm:$0xff]
    %v706 = vld [vmem:[#allocation2 + $0xc0] sm:$0xff]
    %v707 = vld [vmem:[#allocation2 + $0xc8] sm:$0xff]
    %v708 = vld [vmem:[#allocation2 + $0xd0] sm:$0xff]
    %v709 = vld [vmem:[#allocation2 + $0xd8] sm:$0xff]
    %v710 = vld [vmem:[#allocation2 + $0xe0] sm:$0xff]
    %v711 = vld [vmem:[#allocation2 + $0xe8] sm:$0xff]
    %v712 = vld [vmem:[#allocation2 + $0xf0] sm:$0xff]
    %v713 = vld [vmem:[#allocation2 + $0xf8] sm:$0xff]
    %v714 = vld [vmem:[%s9] sm:$0x3]
    %v716 = vlaneseq
    %v717 = vshrl.u32 %v716, 7
    %v718 = vsub.s32 0, %v717
    %v719 = vrot.slane %v714, %v718
    %v720 = vlaneseq
    %v721 = vshrl.u32 %v720, 7
    %v722 = vsub.s32 1, %v721
    %v723 = vrot.slane %v714, %v722
    %726 = vmatprep.subr.mxu0 %v713
    %727 = vmatpush1.msra.mxu0 %v712
    %728 = vmatprep.subr.mxu0 %v711
    %729 = vmatpush1.msra.mxu0 %v710
    %730 = vmatprep.subr.mxu0 %v709
    %731 = vmatpush1.msra.mxu0 %v708
    %732 = vmatprep.subr.mxu0 %v707
    %733 = vmatpush1.msra.mxu0 %v706
    %734 = vmatprep.subr.mxu0 %v705
    %735 = vmatpush1.msra.mxu0 %v704
    %736 = vmatprep.subr.mxu0 %v703
    %737 = vmatpush1.msra.mxu0 %v702
    %738 = vmatprep.subr.mxu0 %v701
    %739 = vmatpush1.msra.mxu0 %v700
    %740 = vmatprep.subr.mxu0 %v699
    %741 = vmatpush1.msra.mxu0 %v698
    %742 = vmatprep.subr.mxu0 %v697
    %743 = vmatpush1.msra.mxu0 %v696
    %744 = vmatprep.subr.mxu0 %v695
    %745 = vmatpush1.msra.mxu0 %v694
    %746 = vmatprep.subr.mxu0 %v693
    %747 = vmatpush1.msra.mxu0 %v692
    %748 = vmatprep.subr.mxu0 %v691
    %749 = vmatpush1.msra.mxu0 %v690
    %750 = vmatprep.subr.mxu0 %v689
    %751 = vmatpush1.msra.mxu0 %v688
    %752 = vmatprep.subr.mxu0 %v687
    %753 = vmatpush1.msra.mxu0 %v686
    %754 = vmatprep.subr.mxu0 %v685
    %755 = vmatpush1.msra.mxu0 %v684
    %756 = vmatprep.subr.mxu0 %v683
    %757 = vmatpush1.msra.mxu0 %v682
    %758 = vmatprep.subr.mxu0 0.0
    %759 = vmatpush2.msra.mxu0 0.0
    %760 = vmatprep.subr.mxu0 0.0
    %761 = vmatpush2.msra.mxu0 0.0
    %762 = vmatprep.subr.mxu0 0.0
    %763 = vmatpush2.msra.mxu0 0.0
    %764 = vmatprep.subr.mxu0 0.0
    %765 = vmatpush2.msra.mxu0 0.0
    %766 = vmatprep.subr.mxu0 0.0
    %767 = vmatpush2.msra.mxu0 0.0
    %768 = vmatprep.subr.mxu0 0.0
    %769 = vmatpush2.msra.mxu0 0.0
    %770 = vmatprep.subr.mxu0 0.0
    %771 = vmatpush2.msra.mxu0 0.0
    %772 = vmatprep.subr.mxu0 0.0
    %773 = vmatpush2.msra.mxu0 0.0
    %774 = vmatprep.subr.mxu0 0.0
    %775 = vmatpush2.msra.mxu0 0.0
    %776 = vmatprep.subr.mxu0 0.0
    %777 = vmatpush2.msra.mxu0 0.0
    %778 = vmatprep.subr.mxu0 0.0
    %779 = vmatpush2.msra.mxu0 0.0
    %780 = vmatprep.subr.mxu0 0.0
    %781 = vmatpush2.msra.mxu0 0.0
    %782 = vmatprep.subr.mxu0 0.0
    %783 = vmatpush2.msra.mxu0 0.0
    %784 = vmatprep.subr.mxu0 0.0
    %785 = vmatpush2.msra.mxu0 0.0
    %786 = vmatprep.subr.mxu0 0.0
    %787 = vmatpush2.msra.mxu0 0.0
    %788 = vmatprep.subr.mxu0 0.0
    %789 = vmatpush2.msra.mxu0 0.0
    %790 = vmatprep.mubr.f32.mxu0 0.0
    %791 = vmatmul.mubr.f32.gmra.mxu0 %v681
    %v792 = vpop.f32.mrf.mxu0
    %v793 = vadd.f32 %v719, %v792
    %v794 = vpop.f32.mrf.mxu0
    %v795 = vadd.f32 %v723, %v794
    %796 = vdwg.mxu0
    %v797 = vmax.f32 %v793, 0.0
    %v798 = vmax.f32 %v795, 0.0
    %v799 = vld [vmem:[#allocation5] sm:$0xff]
    %v800 = vld [vmem:[#allocation5 + $0x8] sm:$0xff]
    %v801 = vld [vmem:[#allocation5 + $0x10] sm:$0xff]
    %v802 = vld [vmem:[#allocation5 + $0x18] sm:$0xff]
    %v803 = vld [vmem:[#allocation5 + $0x20] sm:$0xff]
    %v804 = vld [vmem:[#allocation5 + $0x28] sm:$0xff]
    %v805 = vld [vmem:[#allocation5 + $0x30] sm:$0xff]
    %v806 = vld [vmem:[#allocation5 + $0x38] sm:$0xff]
    %v807 = vld [vmem:[#allocation5 + $0x40] sm:$0xff]
    %v808 = vld [vmem:[#allocation5 + $0x48] sm:$0xff]
    %v809 = vld [vmem:[#allocation5 + $0x50] sm:$0xff]
    %v810 = vld [vmem:[#allocation5 + $0x58] sm:$0xff]
    %v811 = vld [vmem:[#allocation5 + $0x60] sm:$0xff]
    %v812 = vld [vmem:[#allocation5 + $0x68] sm:$0xff]
    %v813 = vld [vmem:[#allocation5 + $0x70] sm:$0xff]
    %v814 = vld [vmem:[#allocation5 + $0x78] sm:$0xff]
    %v815 = vld [vmem:[#allocation5 + $0x80] sm:$0xff]
    %v816 = vld [vmem:[#allocation5 + $0x88] sm:$0xff]
    %v817 = vld [vmem:[#allocation5 + $0x90] sm:$0xff]
    %v818 = vld [vmem:[#allocation5 + $0x98] sm:$0xff]
    %v819 = vld [vmem:[#allocation5 + $0xa0] sm:$0xff]
    %v820 = vld [vmem:[#allocation5 + $0xa8] sm:$0xff]
    %v821 = vld [vmem:[#allocation5 + $0xb0] sm:$0xff]
    %v822 = vld [vmem:[#allocation5 + $0xb8] sm:$0xff]
    %v823 = vld [vmem:[#allocation5 + $0xc0] sm:$0xff]
    %v824 = vld [vmem:[#allocation5 + $0xc8] sm:$0xff]
    %v825 = vld [vmem:[#allocation5 + $0xd0] sm:$0xff]
    %v826 = vld [vmem:[#allocation5 + $0xd8] sm:$0xff]
    %v827 = vld [vmem:[#allocation5 + $0xe0] sm:$0xff]
    %v828 = vld [vmem:[#allocation5 + $0xe8] sm:$0xff]
    %v829 = vld [vmem:[#allocation5 + $0xf0] sm:$0xff]
    %v830 = vld [vmem:[#allocation5 + $0xf8] sm:$0xff]
    %v831 = vld [vmem:[%s11] sm:$0x1]
    %v833 = vlaneseq
    %v834 = vshrl.u32 %v833, 7
    %v835 = vsub.s32 0, %v834
    %v836 = vrot.slane %v831, %v835
    %838 = vmatprep.subr.mxu0 0.0
    %839 = vmatpush1.msra.mxu0 %v814
    %840 = vmatprep.subr.mxu0 0.0
    %841 = vmatpush1.msra.mxu0 %v813
    %842 = vmatprep.subr.mxu0 0.0
    %843 = vmatpush1.msra.mxu0 %v812
    %844 = vmatprep.subr.mxu0 0.0
    %845 = vmatpush1.msra.mxu0 %v811
    %846 = vmatprep.subr.mxu0 0.0
    %847 = vmatpush1.msra.mxu0 %v810
    %848 = vmatprep.subr.mxu0 0.0
    %849 = vmatpush1.msra.mxu0 %v809
    %850 = vmatprep.subr.mxu0 0.0
    %851 = vmatpush1.msra.mxu0 %v808
    %852 = vmatprep.subr.mxu0 0.0
    %853 = vmatpush1.msra.mxu0 %v807
    %854 = vmatprep.subr.mxu0 0.0
    %855 = vmatpush1.msra.mxu0 %v806
    %856 = vmatprep.subr.mxu0 0.0
    %857 = vmatpush1.msra.mxu0 %v805
    %858 = vmatprep.subr.mxu0 0.0
    %859 = vmatpush1.msra.mxu0 %v804
    %860 = vmatprep.subr.mxu0 0.0
    %861 = vmatpush1.msra.mxu0 %v803
    %862 = vmatprep.subr.mxu0 0.0
    %863 = vmatpush1.msra.mxu0 %v802
    %864 = vmatprep.subr.mxu0 0.0
    %865 = vmatpush1.msra.mxu0 %v801
    %866 = vmatprep.subr.mxu0 0.0
    %867 = vmatpush1.msra.mxu0 %v800
    %868 = vmatprep.subr.mxu0 0.0
    %869 = vmatpush1.msra.mxu0 %v799
    %870 = vmatprep.subr.mxu0 0.0
    %871 = vmatpush2.msra.mxu0 %v830
    %872 = vmatprep.subr.mxu0 0.0
    %873 = vmatpush2.msra.mxu0 %v829
    %874 = vmatprep.subr.mxu0 0.0
    %875 = vmatpush2.msra.mxu0 %v828
    %876 = vmatprep.subr.mxu0 0.0
    %877 = vmatpush2.msra.mxu0 %v827
    %878 = vmatprep.subr.mxu0 0.0
    %879 = vmatpush2.msra.mxu0 %v826
    %880 = vmatprep.subr.mxu0 0.0
    %881 = vmatpush2.msra.mxu0 %v825
    %882 = vmatprep.subr.mxu0 0.0
    %883 = vmatpush2.msra.mxu0 %v824
    %884 = vmatprep.subr.mxu0 0.0
    %885 = vmatpush2.msra.mxu0 %v823
    %886 = vmatprep.subr.mxu0 0.0
    %887 = vmatpush2.msra.mxu0 %v822
    %888 = vmatprep.subr.mxu0 0.0
    %889 = vmatpush2.msra.mxu0 %v821
    %890 = vmatprep.subr.mxu0 0.0
    %891 = vmatpush2.msra.mxu0 %v820
    %892 = vmatprep.subr.mxu0 0.0
    %893 = vmatpush2.msra.mxu0 %v819
    %894 = vmatprep.subr.mxu0 0.0
    %895 = vmatpush2.msra.mxu0 %v818
    %896 = vmatprep.subr.mxu0 0.0
    %897 = vmatpush2.msra.mxu0 %v817
    %898 = vmatprep.subr.mxu0 0.0
    %899 = vmatpush2.msra.mxu0 %v816
    %900 = vmatprep.subr.mxu0 0.0
    %901 = vmatpush2.msra.mxu0 %v815
    %902 = vmatprep.mubr.f32.mxu0 %v798
    %903 = vmatmul.mubr.f32.gmra.mxu0 %v797
    %v904 = vpop.f32.mrf.mxu0
    %v905 = vadd.f32 %v836, %v904
    %v906 = vpop.f32.mrf.mxu0
    %907 = vdwg.mxu0
    %908 = vst [vmem:[#allocation7] sm:$0x3] %v905
    // Predicated region
    $region58: #{tpu_custom_call.1} parent=1 // pred_check
      _
    $region59: #{tpu_custom_call.1} parent=1 // pred_check_branch
      %910 = sbr.rel (0) target = $region61
    $region60: #{tpu_custom_call.1} parent=1 // pred_region
      %s912 = ssub.s32 32, 32
      %913 = vsyncadd [#allocation4], %s912
      %s915 = sshll.u32 [#allocation7], 4
      %s916 = int_to_ptr.vmem [resolvable:$true] %s915
      %918 = dma.vmem_to_hbm [thread:$0]  %s916, 32, %s12, [#allocation4]
    $region61: #{tpu_custom_call.1} parent=1 // pred_fallthru
      _
    // Predicated region
    $region62: #{tpu_custom_call.1} parent=1 // pred_check
      _
    $region63: #{tpu_custom_call.1} parent=1 // pred_check_branch
      %920 = sbr.rel (0) target = $region65
    $region64: #{tpu_custom_call.1} parent=1 // pred_region
      %921 = dma.done [#allocation4], 32
    $region65: #{tpu_custom_call.1} parent=1 // pred_fallthru
      _
    %922 = vsyncpa [#allocation3], 1
    %923 = vsyncpa [#allocation6], 1
    %924 = vsyncpa [#allocation4], 1

</llo_original>
